<compile_context>
chip_gen: v7x
topology: tpu7x:2x2x1
jax: 0.10.0
libtpu: 0.0.40
codegen_flags: <defaults>
</compile_context>

<pallas_src>
import jax
import jax.numpy as jnp
import numpy as np
from jax.experimental import pallas as pl
from jax.experimental.pallas import tpu as pltpu


LANE = 128      # lane width (last dim)
SUBLANE = 8     # sublane width (second-to-last dim)
TCHUNK = 8      # GRU time steps processed per grid iteration


def _round_up(x, m):
    return ((x + m - 1) // m) * m


# ----------------------------------------------------------------------------
# Generic tiled matmul-with-bias kernel:  out = A @ B + bias  (fp32 accumulate)
# Used for (a) the hoisted input-to-hidden projection and (b) the vocab
# projection.  Grid = (M/tm, N/tn, K/tk); M and N are "parallel" (second
# TensorCore on v7x), K is the "arbitrary" reduction axis with a VMEM
# accumulator that is initialized / finalized via pl.when.
# ----------------------------------------------------------------------------
def _matmul_bias_kernel(a_ref, b_ref, bias_ref, o_ref, acc_ref):
    @pl.when(pl.program_id(2) == 0)
    def _():
        acc_ref[...] = jnp.zeros_like(acc_ref)

    acc_ref[...] += jnp.dot(a_ref[...].astype(jnp.bfloat16),
                            b_ref[...].astype(jnp.bfloat16),
                            preferred_element_type=jnp.float32)

    @pl.when(pl.program_id(2) == pl.num_programs(2) - 1)
    def _():
        o_ref[...] = (acc_ref[...] + bias_ref[...]).astype(o_ref.dtype)


def matmul_bias(a, b, bias, out_dtype=jnp.float32):
    M, K = a.shape
    K2, N = b.shape
    assert K == K2 and bias.shape == (1, N)
    # Tile preferences: 128 multiples everywhere (v5e 4x128 MXU); 256 for the
    # N tile when it divides (v6e/v7x 2x256 MXU).  Fall back to the full dim
    # (legal per the (8,128)-or-full-dim rule) for small/ragged axes.
    tm = 128 if M % 128 == 0 else M            # M is padded to a mult of 8
    tn = 256 if N % 256 == 0 else (128 if N % 128 == 0 else N)
    tk = 128 if K % 128 == 0 else K
    grid = (M // tm, N // tn, K // tk)
    return pl.pallas_call(
        _matmul_bias_kernel,
        out_shape=jax.ShapeDtypeStruct((M, N), out_dtype),
        grid_spec=pltpu.PrefetchScalarGridSpec(
            num_scalar_prefetch=0,
            grid=grid,
            in_specs=[
                pl.BlockSpec((tm, tk), lambda i, j, k: (i, k)),
                pl.BlockSpec((tk, tn), lambda i, j, k: (k, j)),
                pl.BlockSpec((1, tn), lambda i, j, k: (0, j)),
            ],
            out_specs=pl.BlockSpec((tm, tn), lambda i, j, k: (i, j)),
            scratch_shapes=[pltpu.VMEM((tm, tn), jnp.float32)],
        ),
        compiler_params=pltpu.CompilerParams(
            dimension_semantics=("parallel", "parallel", "arbitrary")),
    )(a, b, bias)


# ----------------------------------------------------------------------------
# GRU recurrence kernel: one grid step = Tc time steps (statically unrolled).
# The input-to-hidden pre-activations gi are precomputed outside the loop, so
# each step only does the unavoidable h-dependent fused gate matmul.
# Gate order follows PyTorch nn.GRU: (r, z, n), each padded to Hp lanes.
# ----------------------------------------------------------------------------
def _gru_chunk_kernel(gi_ref, h0_ref, whh_ref, bhh_ref, hids_ref, h_ref):
    # gi_ref  : (Tc, Bp, 3*Hp) f32   precomputed x @ W_ih^T + b_ih (time-major)
    # h0_ref  : (Bp, Hp)       f32
    # whh_ref : (Hp, 3*Hp)     bf16  fused [r|z|n] hidden-to-hidden weights
    # bhh_ref : (1, 3*Hp)      f32
    # hids_ref: (Bp, Tc, Hp)   f32   batch-major hidden-state output chunk
    # h_ref   : (Bp, Hp)       f32   VMEM hidden carry across grid steps
    @pl.when(pl.program_id(0) == 0)
    def _():
        h_ref[...] = h0_ref[...]

    h = h_ref[...]
    whh = whh_ref[...]
    bhh = bhh_ref[...]
    hp = h.shape[-1]
    tc_steps = gi_ref.shape[0]

    # Statically unrolled chunk loop: all indices are Python ints, so every
    # load/store is static and the LLO scheduler sees the whole chunk.
    for t in range(tc_steps):
        gi = gi_ref[t]                                           # (Bp, 3Hp)
        gh = jnp.dot(h.astype(jnp.bfloat16), whh,                # 1 MXU push
                     preferred_element_type=jnp.float32) + bhh
        r = jax.nn.sigmoid(gi[:, :hp] + gh[:, :hp])
        z = jax.nn.sigmoid(gi[:, hp:2 * hp] + gh[:, hp:2 * hp])
        n = jnp.tanh(gi[:, 2 * hp:] + r * gh[:, 2 * hp:])
        h = (1.0 - z) * n + z * h                                # PyTorch GRU
        hids_ref[:, t:t + 1, :] = h[:, None, :]
    h_ref[...] = h


def decoder_forward_pallas(params, init_hidden, context, inputs):
    """Mirrors Decoder.forward(init_hidden, context, inputs) (batch_first)."""
    emb_table = params["embedding"]                 # (V, E)
    B, T = inputs.shape

    # TODO(synk): embedding gather + repeated-context concat stay as plain-JAX
    # glue (no clean tiled Pallas gather is warranted at these sizes).
    x = jnp.take(emb_table, inputs, axis=0)         # (B, T, E)
    if context is not None:
        rep = jnp.broadcast_to(context[:, None, :], (B, T, context.shape[-1]))
        x = jnp.concatenate([x, rep], axis=-1)      # (B, T, D)
    D = x.shape[-1]
    H = init_hidden.shape[-1]
    V = params["out_w"].shape[0]

    # ---- padded, lane/sublane-dense sizes ----
    Hp = _round_up(H, LANE)
    Vp = _round_up(V, LANE)
    Bp = _round_up(B, SUBLANE)
    Tc = TCHUNK
    Tp = _round_up(T, Tc)

    # ---- weight prep: fused gate layouts; each gate block padded to Hp so
    #      in-kernel gate slices are 128-lane aligned; MXU operands -> bf16 ----
    W_ih = params["gru_w_ih"].reshape(3, H, D)      # gate rows [r; z; n]
    W_hh = params["gru_w_hh"].reshape(3, H, H)
    b_ih = params["gru_b_ih"].reshape(3, H)
    b_hh = params["gru_b_hh"].reshape(3, H)

    wih_all = jnp.transpose(
        jnp.pad(jnp.transpose(W_ih, (0, 2, 1)), ((0, 0), (0, 0), (0, Hp - H))),
        (1, 0, 2)).reshape(D, 3 * Hp).astype(jnp.bfloat16)           # (D, 3Hp)
    whh_all = jnp.transpose(
        jnp.pad(jnp.transpose(W_hh, (0, 2, 1)),
                ((0, 0), (0, Hp - H), (0, Hp - H))),
        (1, 0, 2)).reshape(Hp, 3 * Hp).astype(jnp.bfloat16)          # (Hp, 3Hp)
    bih_all = jnp.pad(b_ih, ((0, 0), (0, Hp - H))).reshape(1, 3 * Hp)
    bhh_all = jnp.pad(b_hh, ((0, 0), (0, Hp - H))).reshape(1, 3 * Hp)

    wout = jnp.pad(params["out_w"].T,
                   ((0, Hp - H), (0, Vp - V))).astype(jnp.bfloat16)  # (Hp, Vp)
    bout = jnp.pad(params["out_b"], (0, Vp - V)).reshape(1, Vp)      # (1, Vp)

    h0 = jnp.pad(init_hidden.astype(jnp.float32),
                 ((0, Bp - B), (0, Hp - H)))                         # (Bp, Hp)

    # ---- 1) hoisted input projection: one big bf16 matmul over all (t, b) ----
    x_tbd = jnp.pad(jnp.transpose(x, (1, 0, 2)),
                    ((0, Tp - T), (0, Bp - B), (0, 0))).astype(jnp.bfloat16)
    gi = matmul_bias(x_tbd.reshape(Tp * Bp, D), wih_all, bih_all,
                     out_dtype=jnp.float32).reshape(Tp, Bp, 3 * Hp)

    # ---- 2) serial GRU recurrence: Tc time steps per grid iteration,
    #         hidden carry in VMEM scratch, hids written batch-major ----
    hids = pl.pallas_call(
        _gru_chunk_kernel,
        out_shape=jax.ShapeDtypeStruct((Bp, Tp, Hp), jnp.float32),
        grid_spec=pltpu.PrefetchScalarGridSpec(
            num_scalar_prefetch=0,
            grid=(Tp // Tc,),
            in_specs=[
                pl.BlockSpec((Tc, Bp, 3 * Hp), lambda c: (c, 0, 0)),  # gi chunk
                # Constant operands (block never changes across the grid);
                # at these sizes the default double-buffer costs little --
                # pl.Buffered(1) would halve their VMEM residency at scale.
                pl.BlockSpec((Bp, Hp), lambda c: (0, 0)),             # h0
                pl.BlockSpec((Hp, 3 * Hp), lambda c: (0, 0)),         # W_hh fused
                pl.BlockSpec((1, 3 * Hp), lambda c: (0, 0)),          # b_hh fused
            ],
            out_specs=pl.BlockSpec((Bp, Tc, Hp), lambda c: (0, c, 0)),
            scratch_shapes=[pltpu.VMEM((Bp, Hp), jnp.float32)],       # h carry
        ),
        compiler_params=pltpu.CompilerParams(
            dimension_semantics=("arbitrary",)),      # time is sequential
    )(gi, h0, whh_all, bhh_all)

    # ---- 3) vocab projection: tiled (B*T, Hp) x (Hp, Vp) matmul; hids are
    #         already batch-major so logits land directly in (B, T, V) ----
    logits = matmul_bias(hids.reshape(Bp * Tp, Hp), wout, bout,
                         out_dtype=jnp.float32).reshape(Bp, Tp, Vp)
    return logits[:B, :T, :V]


# ----------------------------------------------------------------------------
# Pure-JAX fp32 reference (PyTorch nn.GRU + nn.Linear semantics).
# ----------------------------------------------------------------------------
def decoder_forward_ref(params, init_hidden, context, inputs):
    emb_table = params["embedding"]
    B, T = inputs.shape
    x = jnp.take(emb_table, inputs, axis=0)
    if context is not None:
        rep = jnp.broadcast_to(context[:, None, :], (B, T, context.shape[-1]))
        x = jnp.concatenate([x, rep], axis=-1)

    W_ih, W_hh = params["gru_w_ih"], params["gru_w_hh"]
    b_ih, b_hh = params["gru_b_ih"], params["gru_b_hh"]

    def step(h, xt):
        gi = xt @ W_ih.T + b_ih
        gh = h @ W_hh.T + b_hh
        i_r, i_z, i_n = jnp.split(gi, 3, axis=-1)
        h_r, h_z, h_n = jnp.split(gh, 3, axis=-1)
        r = jax.nn.sigmoid(i_r + h_r)
        z = jax.nn.sigmoid(i_z + h_z)
        n = jnp.tanh(i_n + r * h_n)
        h_new = (1.0 - z) * n + z * h
        return h_new, h_new

    _, hids = jax.lax.scan(step, init_hidden, jnp.transpose(x, (1, 0, 2)))
    hids = jnp.transpose(hids, (1, 0, 2))                        # (B, T, H)
    return hids @ params["out_w"].T + params["out_b"]            # (B, T, V)


# ----------------------------------------------------------------------------
# Deterministic parameter construction + smoke test.
# ----------------------------------------------------------------------------
def make_params(key, vocab_size, emb_dim, input_size, hidden_size):
    ks = jax.random.split(key, 6)
    initrange = 0.1
    return {
        # embedder: nn.Embedding(vocab_size, emb_dim)
        "embedding": jax.random.uniform(ks[0], (vocab_size, emb_dim),
                                        jnp.float32, -1.0, 1.0),
        # nn.GRU(input_size, hidden_size): weight_ih_l0 (3H, D), weight_hh_l0 (3H, H)
        "gru_w_ih": jax.random.uniform(ks[1], (3 * hidden_size, input_size),
                                       jnp.float32, -0.3, 0.3),
        "gru_w_hh": jax.random.uniform(ks[2], (3 * hidden_size, hidden_size),
                                       jnp.float32, -0.3, 0.3),
        "gru_b_ih": jax.random.uniform(ks[3], (3 * hidden_size,),
                                       jnp.float32, -0.1, 0.1),
        "gru_b_hh": jax.random.uniform(ks[4], (3 * hidden_size,),
                                       jnp.float32, -0.1, 0.1),
        # nn.Linear(hidden_size, vocab_size): uniform(-0.1, 0.1), bias = 0
        "out_w": jax.random.uniform(ks[5], (vocab_size, hidden_size),
                                    jnp.float32, -initrange, initrange),
        "out_b": jnp.zeros((vocab_size,), jnp.float32),
    }


if __name__ == "__main__":
    # Small shapes consistent with the module's forward:
    #   inputs: (batch, maxlen) token ids; context: (batch, ctx_dim);
    #   init_hidden: (batch, hidden); input_size = emb_dim + ctx_dim.
    B, T = 2, 16
    vocab_size = 100
    emb_dim = 16
    ctx_dim = 16
    input_size = emb_dim + ctx_dim       # 32
    hidden_size = 32

    key = jax.random.PRNGKey(0)
    k_par, k_in, k_ctx, k_h0 = jax.random.split(key, 4)

    params = make_params(k_par, vocab_size, emb_dim, input_size, hidden_size)
    inputs = jax.random.randint(k_in, (B, T), 0, vocab_size, dtype=jnp.int32)
    context = jax.random.normal(k_ctx, (B, ctx_dim), jnp.float32)
    init_hidden = jax.random.normal(k_h0, (B, hidden_size), jnp.float32)

    decoded = jax.block_until_ready(
        decoder_forward_pallas(params, init_hidden, context, inputs))
    ref = jax.block_until_ready(
        decoder_forward_ref(params, init_hidden, context, inputs))

    assert decoded.shape == (B, T, vocab_size), decoded.shape
    # bf16 MXU path with fp32 accumulation vs. pure-fp32 reference.
    np.testing.assert_allclose(np.asarray(decoded), np.asarray(ref),
                               rtol=5e-2, atol=5e-2)
    print("KERNEL_OK")
</pallas_src>

<mosaic_0001>
module attributes {stable_mosaic.version = 11 : i64} {
  func.func @_matmul_bias_kernel(%arg0: i32, %arg1: i32, %arg2: i32, %arg3: memref<128x32xbf16, #tpu.memory_space<vmem>>, %arg4: memref<32x128xbf16, #tpu.memory_space<vmem>>, %arg5: memref<1x128xf32, #tpu.memory_space<vmem>>, %arg6: memref<128x128xf32, #tpu.memory_space<vmem>>, %arg7: memref<128x128xf32, #tpu.memory_space<vmem>>) attributes {dimension_semantics = [#tpu.dimension_semantics<parallel>, #tpu.dimension_semantics<parallel>, #tpu.dimension_semantics<arbitrary>], iteration_bounds = array<i64: 1, 3, 1>, scalar_prefetch = 0 : i64, scratch_operands = 1 : i64, tpu.core_type = #tpu.core_type<tc>, window_params = [{transform_indices = @transform_0, window_bounds = array<i64: 128, 32>}, {transform_indices = @transform_1, window_bounds = array<i64: 32, 128>}, {transform_indices = @transform_2, window_bounds = array<i64: 1, 128>}, {transform_indices = @transform_3, window_bounds = array<i64: 128, 128>}]} {
    %c0_i32 = arith.constant 0 : i32
    %0 = arith.cmpi eq, %arg2, %c0_i32 : i32
    %1 = arith.extui %0 : i1 to i32
    %c0_i32_0 = arith.constant 0 : i32
    %2 = arith.cmpi ne, %1, %c0_i32_0 : i32
    scf.if %2 {
      %cst_10 = arith.constant 0.000000e+00 : f32
      %12 = vector.broadcast %cst_10 : f32 to vector<128x128xf32>
      %c0_11 = arith.constant 0 : index
      %c0_12 = arith.constant 0 : index
      %13 = vector.load %arg7[%c0_11, %c0_12] : memref<128x128xf32, #tpu.memory_space<vmem>>, vector<128x128xf32>
      tpu.vector_store %arg7[%c0_11, %c0_12], %12 {strides = array<i32>} : memref<128x128xf32, #tpu.memory_space<vmem>>, vector<128x128xf32>,
    } else {
    }
    %c0 = arith.constant 0 : index
    %c0_1 = arith.constant 0 : index
    %3 = vector.load %arg7[%c0, %c0_1] : memref<128x128xf32, #tpu.memory_space<vmem>>, vector<128x128xf32>
    %c0_2 = arith.constant 0 : index
    %c0_3 = arith.constant 0 : index
    %4 = vector.load %arg3[%c0_2, %c0_3] : memref<128x32xbf16, #tpu.memory_space<vmem>>, vector<128x32xbf16>
    %c0_4 = arith.constant 0 : index
    %c0_5 = arith.constant 0 : index
    %5 = vector.load %arg4[%c0_4, %c0_5] : memref<32x128xbf16, #tpu.memory_space<vmem>>, vector<32x128xbf16>
    %cst = arith.constant dense<0.000000e+00> : vector<128x128xf32>
    %6 = tpu.matmul %4, %5, %cst {dimension_numbers = #tpu.dot_dimension_numbers<[1], [0], [0], [1], [0, 0, 1, 1], [], []>} : vector<128x32xbf16>, vector<32x128xbf16>, vector<128x128xf32> -> vector<128x128xf32>
    %7 = arith.addf %3, %6 : vector<128x128xf32>
    %c0_6 = arith.constant 0 : index
    %c0_7 = arith.constant 0 : index
    %8 = vector.load %arg7[%c0_6, %c0_7] : memref<128x128xf32, #tpu.memory_space<vmem>>, vector<128x128xf32>
    tpu.vector_store %arg7[%c0_6, %c0_7], %7 {strides = array<i32>} : memref<128x128xf32, #tpu.memory_space<vmem>>, vector<128x128xf32>,
    %c0_i32_8 = arith.constant 0 : i32
    %9 = arith.cmpi eq, %arg2, %c0_i32_8 : i32
    %10 = arith.extui %9 : i1 to i32
    %c0_i32_9 = arith.constant 0 : i32
    %11 = arith.cmpi ne, %10, %c0_i32_9 : i32
    scf.if %11 {
      %c0_10 = arith.constant 0 : index
      %c0_11 = arith.constant 0 : index
      %12 = vector.load %arg7[%c0_10, %c0_11] : memref<128x128xf32, #tpu.memory_space<vmem>>, vector<128x128xf32>
      %c0_12 = arith.constant 0 : index
      %c0_13 = arith.constant 0 : index
      %13 = vector.load %arg5[%c0_12, %c0_13] : memref<1x128xf32, #tpu.memory_space<vmem>>, vector<1x128xf32>
      %14 = vector.broadcast %13 : vector<1x128xf32> to vector<128x128xf32>
      %15 = arith.addf %12, %14 : vector<128x128xf32>
      %c0_14 = arith.constant 0 : index
      %c0_15 = arith.constant 0 : index
      %16 = vector.load %arg6[%c0_14, %c0_15] : memref<128x128xf32, #tpu.memory_space<vmem>>, vector<128x128xf32>
      tpu.vector_store %arg6[%c0_14, %c0_15], %15 {strides = array<i32>} : memref<128x128xf32, #tpu.memory_space<vmem>>, vector<128x128xf32>,
    } else {
    }
    return
  }
  func.func @transform_0(%arg0: i32, %arg1: i32, %arg2: i32) -> (i32, i32) {
    %c0_i32 = arith.constant 0 : i32
    return %arg0, %arg2 : i32, i32
  }
  func.func @transform_1(%arg0: i32, %arg1: i32, %arg2: i32) -> (i32, i32) {
    %c0_i32 = arith.constant 0 : i32
    return %arg2, %arg1 : i32, i32
  }
  func.func @transform_2(%arg0: i32, %arg1: i32, %arg2: i32) -> (i32, i32) {
    %c0_i32 = arith.constant 0 : i32
    %c0_i32_0 = arith.constant 0 : i32
    return %c0_i32, %arg1 : i32, i32
  }
  func.func @transform_3(%arg0: i32, %arg1: i32, %arg2: i32) -> (i32, i32) {
    %c0_i32 = arith.constant 0 : i32
    return %arg0, %arg1 : i32, i32
  }
}

</mosaic_0001>

<llo_original>
// kernel: tpu_custom_call.1
$region0: #{tpu_custom_call.1}
  #allocation0 [shape = 'u32[]', space=smem, size = 0x4, offset = 0x4, fixed_abs, tag = 'smem constant byte address 0x4 - core index']
  #allocation1 [shape = 'u32[144,128]{1,0:T(1,128)}', space=vmem, size = 0x12000, scoped, tag = 'internal scratch']
  #allocation2 [shape = 'f32[128,128]{1,0:T(8,128)}', space=vmem, size = 0x10000, scoped, tag = 'scratch operand']
  %s0 = inlined_call_operand.vmem [shape: bf16[128,32], index: 0, kind: input, shape index: {}]
  %s1 = inlined_call_operand.vmem [shape: bf16[32,384], index: 1, kind: input, shape index: {}]
  %s2 = inlined_call_operand.vmem [shape: f32[1,384], index: 2, kind: input, shape index: {}]
  %s3 = inlined_call_operand.hbm [shape: f32[128,384], index: 3, kind: output, shape index: {}]
  %s4 = sld [smem:[#allocation0]]
  $region94: #{tpu_custom_call.1} parent=0
    _
  %s6 = ssub.s32 1, %s4
  %s7 = scalar_select 0, %s6, %s4
  $region1: #{tpu_custom_call.1} parent=0
    #allocation3 [shape = 'u8[16384]{0}', space=vmem, size = 0x4000, scoped, tag = 'input window, operand 1']
    #allocation4 [shape = 'u8[131072]{0}', space=vmem, size = 0x20000, scoped, tag = 'output window, operand 0']
    #allocation5 [shape = 's32[2]{0}', space=sflag, size = 0x8, scoped, tag = 'scoped memory for tpu_custom_call.1']
    %8 = vsyncpa [#allocation5], 0
    %s9 = scalar_lea.sflag [#allocation5], 1
    %10 = vsyncpa %s9, 0
    loop: start=0, step=1, limit=5
    $region2: #{tpu_custom_call.1} parent=1 // loop_pre_header
      _
    $region3: #{tpu_custom_call.1} parent=1 // loop_header
      %s12 = sphi 0, %s16
      %p13 = scmp.ge.s32.totalorder %s12, 5
      %s19 = sphi 0, %s38
      %s20 = sphi 0, %s34
      %s21 = sphi 0, %s30
      %s22 = sphi 0, %s19
      %s23 = sphi 0, %s20
      %s24 = sphi 0, %s21
      %s25 = sphi 0, %s22
      %s26 = sphi 0, %s23
      %s27 = sphi 0, %s24
      %s43 = sphi 0, %s45
      %s46 = sphi 0, %s43
      %s47 = sphi 0, %s46
      %s63 = sphi 0, %s47
      %s71 = sphi 0, %s73
      %s74 = sphi 0, %s71
      %s75 = sphi 0, %s74
      %s91 = sphi 0, %s75
      %s97 = sphi 0, %s99
      %s100 = sphi 0, %s97
      %s101 = sphi 0, %s100
      %s117 = sphi 0, %s101
      %s125 = sphi 0, %s127
      %s128 = sphi 0, %s125
      %s129 = sphi 0, %s128
      %s145 = sphi 0, %s129
    $region4: #{tpu_custom_call.1} parent=1 // loop_header_branch
      %15 = sbr.rel (%p13) target = $region8
    $region5: #{tpu_custom_call.1} parent=1 // loop_body
      %s17 = ssub.s32 %s12, 1
      %s18 = ssub.s32 %s12, 2
      %s28 = sadd.s32 1, %s21
      %p29 = scmp.ge.s32.totalorder %s28, 1
      %s30 = scalar_select %p29, 0, %s28
      %s31 = sadd.s32 1, %s20
      %s32 = scalar_select %p29, %s31, %s20
      %p33 = scmp.ge.s32.totalorder %s32, 3
      %s34 = scalar_select %p33, 0, %s32
      %s35 = sadd.s32 1, %s19
      %s36 = scalar_select %p33, %s35, %s19
      %p37 = scmp.ge.s32.totalorder %s36, 1
      %s38 = scalar_select %p37, 0, %s36
      %s39 = ssub.s32 %s19, %s38
      %s40 = ssub.s32 %s21, %s30
      %s41 = sor.u32 %s39, %s40
      %p42 = scmp.eq.s32.totalorder %s41, 0
      %s44 = sadd.s32 %s43, 1
      %s45 = scalar_select %p42, %s43, %s44
      %p48 = pneg %p42
      %p49 = scmp.eq.s32.totalorder %s12, 2
      %p50 = por %p48, %p49
      %p51 = scmp.ne.s32.totalorder %s43, %s46
      %p52 = scmp.eq.s32.totalorder %s12, 0
      %p53 = por %p51, %p52
      %p54 = scmp.ne.s32.totalorder %s43, %s46
      %p55 = scmp.eq.s32.totalorder %s17, 2
      %p56 = por %p54, %p55
      %p57 = scmp.ne.s32.totalorder %s46, %s47
      %p58 = scmp.eq.s32.totalorder %s17, 0
      %p59 = por %p57, %p58
      %p60 = scmp.ne.s32.totalorder %s46, %s47
      %p61 = scmp.eq.s32.totalorder %s18, 2
      %p62 = por %p60, %p61
      %p64 = scmp.ne.s32.totalorder %s47, %s63
      %p65 = scmp.eq.s32.totalorder %s18, 0
      %p66 = por %p64, %p65
      %s67 = ssub.s32 %s21, %s30
      %s68 = ssub.s32 %s20, %s34
      %s69 = sor.u32 %s67, %s68
      %p70 = scmp.eq.s32.totalorder %s69, 0
      %s72 = sadd.s32 %s71, 1
      %s73 = scalar_select %p70, %s71, %s72
      %p76 = pneg %p70
      %p77 = scmp.eq.s32.totalorder %s12, 2
      %p78 = por %p76, %p77
      %p79 = scmp.ne.s32.totalorder %s71, %s74
      %p80 = scmp.eq.s32.totalorder %s12, 0
      %p81 = por %p79, %p80
      %p82 = scmp.ne.s32.totalorder %s71, %s74
      %p83 = scmp.eq.s32.totalorder %s17, 2
      %p84 = por %p82, %p83
      %p85 = scmp.ne.s32.totalorder %s74, %s75
      %p86 = scmp.eq.s32.totalorder %s17, 0
      %p87 = por %p85, %p86
      %p88 = scmp.ne.s32.totalorder %s74, %s75
      %p89 = scmp.eq.s32.totalorder %s18, 2
      %p90 = por %p88, %p89
      %p92 = scmp.ne.s32.totalorder %s75, %s91
      %p93 = scmp.eq.s32.totalorder %s18, 0
      %p94 = por %p92, %p93
      %s95 = ssub.s32 %s20, %s34
      %p96 = scmp.eq.s32.totalorder %s95, 0
      %s98 = sadd.s32 %s97, 1
      %s99 = scalar_select %p96, %s97, %s98
      %p102 = pneg %p96
      %p103 = scmp.eq.s32.totalorder %s12, 2
      %p104 = por %p102, %p103
      %p105 = scmp.ne.s32.totalorder %s97, %s100
      %p106 = scmp.eq.s32.totalorder %s12, 0
      %p107 = por %p105, %p106
      %p108 = scmp.ne.s32.totalorder %s97, %s100
      %p109 = scmp.eq.s32.totalorder %s17, 2
      %p110 = por %p108, %p109
      %p111 = scmp.ne.s32.totalorder %s100, %s101
      %p112 = scmp.eq.s32.totalorder %s17, 0
      %p113 = por %p111, %p112
      %p114 = scmp.ne.s32.totalorder %s100, %s101
      %p115 = scmp.eq.s32.totalorder %s18, 2
      %p116 = por %p114, %p115
      %p118 = scmp.ne.s32.totalorder %s101, %s117
      %p119 = scmp.eq.s32.totalorder %s18, 0
      %p120 = por %p118, %p119
      %s121 = ssub.s32 %s19, %s38
      %s122 = ssub.s32 %s20, %s34
      %s123 = sor.u32 %s121, %s122
      %p124 = scmp.eq.s32.totalorder %s123, 0
      %s126 = sadd.s32 %s125, 1
      %s127 = scalar_select %p124, %s125, %s126
      %p130 = pneg %p124
      %p131 = scmp.eq.s32.totalorder %s12, 2
      %p132 = por %p130, %p131
      %p133 = scmp.ne.s32.totalorder %s125, %s128
      %p134 = scmp.eq.s32.totalorder %s12, 0
      %p135 = por %p133, %p134
      %p136 = scmp.ne.s32.totalorder %s125, %s128
      %p137 = scmp.eq.s32.totalorder %s17, 2
      %p138 = por %p136, %p137
      %p139 = scmp.ne.s32.totalorder %s128, %s129
      %p140 = scmp.eq.s32.totalorder %s17, 0
      %p141 = por %p139, %p140
      %p142 = scmp.ne.s32.totalorder %s128, %s129
      %p143 = scmp.eq.s32.totalorder %s18, 2
      %p144 = por %p142, %p143
      %p146 = scmp.ne.s32.totalorder %s129, %s145
      %p147 = scmp.eq.s32.totalorder %s18, 0
      %p148 = por %p146, %p147
      %p149 = scmp.le.s32.totalorder 1, %s12
      %p150 = scmp.lt.s32.totalorder %s12, 4
      %p151 = pnand %p149, %p150
      %p152 = pneg %p151
      // Predicated region
      $region9: #{tpu_custom_call.1} parent=5 // pred_check
        _
      $region10: #{tpu_custom_call.1} parent=5 // pred_check_branch
        %154 = sbr.rel (%p151) target = $region12
      $region11: #{tpu_custom_call.1} parent=5 // pred_region
        %s155 = ssub.s32 %s12, 1
        // Predicated region
        $region13: #{tpu_custom_call.1} parent=11 // pred_check
          %p156 = pneg %p59
        $region14: #{tpu_custom_call.1} parent=11 // pred_check_branch
          %158 = sbr.rel (%p156) target = $region16
        $region15: #{tpu_custom_call.1} parent=11 // pred_region
          %s159 = smul.u32 16, %s22
          %p160 = scmp.lt.s32.totalorder %s159, 15
          %s161 = scalar_select %p160, %s159, 15
          %p162 = scmp.lt.s32.totalorder %s24, 0
          %s163 = scalar_select %p162, %s24, 0
          %s164 = sadd.s32 %s163, %s161
          %s165 = smul.addr %s164, 4
          %s166 = scalar_lea.vmem %s0, %s165
          %s167 = smul.u32 16, %s22
        $region16: #{tpu_custom_call.1} parent=11 // pred_fallthru
          _
      $region12: #{tpu_custom_call.1} parent=5 // pred_fallthru
        _
      %p168 = scmp.lt.s32.totalorder %s12, 3
      // Predicated region
      $region17: #{tpu_custom_call.1} parent=5 // pred_check
        %p169 = pneg %p168
      $region18: #{tpu_custom_call.1} parent=5 // pred_check_branch
        %171 = sbr.rel (%p169) target = $region20
      $region19: #{tpu_custom_call.1} parent=5 // pred_region
        // Predicated region
        $region21: #{tpu_custom_call.1} parent=19 // pred_check
          %p172 = pneg %p81
        $region22: #{tpu_custom_call.1} parent=19 // pred_check_branch
          %174 = sbr.rel (%p172) target = $region24
        $region23: #{tpu_custom_call.1} parent=19 // pred_region
          %s175 = sand.u32 %s71, 1
          %s176 = sand.u32 %s71, 1
          %s177 = smul.addr %s176, 16
          %s178 = scalar_lea.vmem [#allocation3], %s177
          %s179 = smul.u32 4, %s21
          %s180 = smul.addr %s179, 3
          %s181 = sadd.s32 %s20, %s180
          %s182 = smul.addr %s181, 4
          %s183 = scalar_lea.vmem %s1, %s182
          // Predicated region
          $region25: #{tpu_custom_call.1} parent=23 // pred_check
            _
          $region26: #{tpu_custom_call.1} parent=23 // pred_check_branch
            %185 = sbr.rel (0) target = $region28
          $region27: #{tpu_custom_call.1} parent=23 // pred_region
            // Predicated region
            $region29: #{tpu_custom_call.1} parent=27 // pred_check
              _
            $region30: #{tpu_custom_call.1} parent=27 // pred_check_branch
              %187 = sbr.rel target = $region32
            $region31: #{tpu_custom_call.1} parent=27 // pred_region
              // Predicated region
              $region44: #{tpu_custom_call.1} parent=31 // pred_check
                _
              $region45: #{tpu_custom_call.1} parent=31 // pred_check_branch
                %208 = sbr.rel (0) target = $region47
              $region46: #{tpu_custom_call.1} parent=31 // pred_region
                loop: start=0, step=1, limit=1
                $region48: #{tpu_custom_call.1} parent=46 // loop_pre_header
                  _
                $region49: #{tpu_custom_call.1} parent=46 // loop_header
                  %s210 = sphi 0, %s214
                  %p211 = scmp.ge.s32.totalorder %s210, 1
                  %s215 = sphi %s183, %s183
                  %s216 = sphi %s178, %s178
                $region50: #{tpu_custom_call.1} parent=46 // loop_header_branch
                  %213 = sbr.rel (%p211) target = $region54
                $region51: #{tpu_custom_call.1} parent=46 // loop_body
                  _
                $region52: #{tpu_custom_call.1} parent=46 // loop_footer
                  %s214 = sadd.s32 1, %s210
                $region53: #{tpu_custom_call.1} parent=46 // loop_footer_branch
                  %209 = sbr.rel target = $region49
                $region54: #{tpu_custom_call.1} parent=46 // loop_exit
                  _
                loop: start=0, step=1, limit=1
                $region55: #{tpu_custom_call.1} parent=46 // loop_pre_header
                  _
                $region56: #{tpu_custom_call.1} parent=46 // loop_header
                  %s219 = sphi 0, %s223
                  %p220 = scmp.ge.s32.totalorder %s219, 1
                  %s224 = sphi %s183, %s183
                  %s225 = sphi %s178, %s178
                $region57: #{tpu_custom_call.1} parent=46 // loop_header_branch
                  %222 = sbr.rel (%p220) target = $region61
                $region58: #{tpu_custom_call.1} parent=46 // loop_body
                  %v226 = vld [vmem:[%s224] sm:$0xf]
                  %227 = vst [vmem:[%s225] sm:$0xf] %v226
                  %v228 = vld [vmem:[%s224 + $0xc] sm:$0xf]
                  %229 = vst [vmem:[%s225 + $0x4] sm:$0xf] %v228
                  %v230 = vld [vmem:[%s224 + $0x18] sm:$0xf]
                  %231 = vst [vmem:[%s225 + $0x8] sm:$0xf] %v230
                  %v232 = vld [vmem:[%s224 + $0x24] sm:$0xf]
                  %233 = vst [vmem:[%s225 + $0xc] sm:$0xf] %v232
                $region59: #{tpu_custom_call.1} parent=46 // loop_footer
                  %s223 = sadd.s32 1, %s219
                $region60: #{tpu_custom_call.1} parent=46 // loop_footer_branch
                  %218 = sbr.rel target = $region56
                $region61: #{tpu_custom_call.1} parent=46 // loop_exit
                  _
              $region47: #{tpu_custom_call.1} parent=31 // pred_fallthru
                _
            $region32: #{tpu_custom_call.1} parent=27 // pred_fallthru
              _
            // Predicated region
            $region33: #{tpu_custom_call.1} parent=27 // pred_check
              _
            $region34: #{tpu_custom_call.1} parent=27 // pred_check_branch
              %189 = sbr.rel (0) target = $region36
            $region35: #{tpu_custom_call.1} parent=27 // pred_region
              loop: start=0, step=1, limit=1
              $region37: #{tpu_custom_call.1} parent=35 // loop_pre_header
                _
              $region38: #{tpu_custom_call.1} parent=35 // loop_header
                %s192 = sphi 0, %s196
                %p193 = scmp.ge.s32.totalorder %s192, 1
                %s197 = sphi %s183, %s183
                %s198 = sphi %s178, %s178
              $region39: #{tpu_custom_call.1} parent=35 // loop_header_branch
                %195 = sbr.rel (%p193) target = $region43
              $region40: #{tpu_custom_call.1} parent=35 // loop_body
                %v199 = vld [vmem:[%s197] sm:$0xf]
                %200 = vst [vmem:[%s198] sm:$0xf] %v199
                %v201 = vld [vmem:[%s197 + $0xc] sm:$0xf]
                %202 = vst [vmem:[%s198 + $0x4] sm:$0xf] %v201
                %v203 = vld [vmem:[%s197 + $0x18] sm:$0xf]
                %204 = vst [vmem:[%s198 + $0x8] sm:$0xf] %v203
                %v205 = vld [vmem:[%s197 + $0x24] sm:$0xf]
                %206 = vst [vmem:[%s198 + $0xc] sm:$0xf] %v205
              $region41: #{tpu_custom_call.1} parent=35 // loop_footer
                %s196 = sadd.s32 1, %s192
              $region42: #{tpu_custom_call.1} parent=35 // loop_footer_branch
                %191 = sbr.rel target = $region38
              $region43: #{tpu_custom_call.1} parent=35 // loop_exit
                _
            $region36: #{tpu_custom_call.1} parent=27 // pred_fallthru
              _
          $region28: #{tpu_custom_call.1} parent=23 // pred_fallthru
            _
          %234 = vnop
        $region24: #{tpu_custom_call.1} parent=19 // pred_fallthru
          _
        // Predicated region
        $region62: #{tpu_custom_call.1} parent=19 // pred_check
          %p235 = pneg %p107
        $region63: #{tpu_custom_call.1} parent=19 // pred_check_branch
          %237 = sbr.rel (%p235) target = $region65
        $region64: #{tpu_custom_call.1} parent=19 // pred_region
          %p238 = scmp.lt.s32.totalorder %s20, 2
          %s239 = scalar_select %p238, %s20, 2
          %s240 = scalar_lea.vmem %s2, %s239
        $region65: #{tpu_custom_call.1} parent=19 // pred_fallthru
          _
      $region20: #{tpu_custom_call.1} parent=5 // pred_fallthru
        _
      %p241 = scmp.le.s32.totalorder 1, %s12
      %p242 = scmp.lt.s32.totalorder %s12, 4
      %p243 = pnand %p241, %p242
      %p244 = pneg %p243
      // Predicated region
      $region66: #{tpu_custom_call.1} parent=5 // pred_check
        _
      $region67: #{tpu_custom_call.1} parent=5 // pred_check_branch
        %246 = sbr.rel (%p243) target = $region69
      $region68: #{tpu_custom_call.1} parent=5 // pred_region
        %s247 = ssub.s32 %s12, 1
        %s248 = sand.u32 %s74, 1
        %s249 = sand.u32 %s74, 1
        %s250 = smul.addr %s249, 16
        %s251 = scalar_lea.vmem [#allocation3], %s250
        // Predicated region
        $region70: #{tpu_custom_call.1} parent=68 // pred_check
          %p252 = pneg %p87
        $region71: #{tpu_custom_call.1} parent=68 // pred_check_branch
          %254 = sbr.rel (%p252) target = $region73
        $region72: #{tpu_custom_call.1} parent=68 // pred_region
          _
        $region73: #{tpu_custom_call.1} parent=68 // pred_fallthru
          _
        %s255 = smul.u32 16, %s22
        %p256 = scmp.lt.s32.totalorder %s255, 15
        %s257 = scalar_select %p256, %s255, 15
        %p258 = scmp.lt.s32.totalorder %s24, 0
        %s259 = scalar_select %p258, %s24, 0
        %s260 = sadd.s32 %s259, %s257
        %s261 = smul.addr %s260, 4
        %s262 = scalar_lea.vmem %s0, %s261
        %p263 = pneg %p59
        %p264 = pneg %p56
        %s265 = sand.u32 %s74, 1
        %s266 = sand.u32 %s74, 1
        %s267 = smul.addr %s266, 16
        %s268 = scalar_lea.vmem [#allocation3], %s267
        %p269 = pneg %p87
        %p270 = pneg %p84
        %p271 = scmp.lt.s32.totalorder %s23, 2
        %s272 = scalar_select %p271, %s23, 2
        %s273 = scalar_lea.vmem %s2, %s272
        %p274 = pneg %p113
        %p275 = pneg %p110
        %p276 = pneg %p141
        %p277 = pneg %p138
        %s278 = sand.u32 %s128, 1
        %s279 = scalar_lea.sflag [#allocation5], %s278
        %s280 = sand.u32 %s128, 1
        %s281 = smul.addr %s280, 128
        %s282 = scalar_lea.vmem [#allocation4], %s281
        %s283 = smul.u32 16, %s22
        %p284 = scmp.lt.s32.totalorder %s283, 15
        %s285 = scalar_select %p284, %s283, 15
        %p286 = scmp.lt.s32.totalorder %s24, 0
        %s287 = scalar_select %p286, %s24, 0
        %s288 = sadd.s32 %s287, %s285
        %s289 = smul.addr %s288, 4
        %s290 = scalar_lea.vmem %s0, %s289
        %s291 = smul.u32 16, %s22
        %s292 = smul.u32 4, %s24
        %p293 = scmp.lt.s32.totalorder %s23, 2
        %s294 = scalar_select %p293, %s23, 2
        %s295 = scalar_lea.vmem %s2, %s294
        %s296 = smul.u32 16, %s22
        %p298 = scmp.eq.s32.totalorder %s24, 0
        // Predicated region
        $region74: #{tpu_custom_call.1} parent=68 // pred_check
          %p299 = pneg %p298
        $region75: #{tpu_custom_call.1} parent=68 // pred_check_branch
          %301 = sbr.rel (%p299) target = $region77
        $region76: #{tpu_custom_call.1} parent=68 // pred_region
          %302 = vst [vmem:[#allocation2] sm:$0xff] 0.0
          %303 = vst [vmem:[#allocation2 + $0x8] sm:$0xff] 0.0
          %304 = vst [vmem:[#allocation2 + $0x10] sm:$0xff] 0.0
          %305 = vst [vmem:[#allocation2 + $0x18] sm:$0xff] 0.0
          %306 = vst [vmem:[#allocation2 + $0x20] sm:$0xff] 0.0
          %307 = vst [vmem:[#allocation2 + $0x28] sm:$0xff] 0.0
          %308 = vst [vmem:[#allocation2 + $0x30] sm:$0xff] 0.0
          %309 = vst [vmem:[#allocation2 + $0x38] sm:$0xff] 0.0
          %310 = vst [vmem:[#allocation2 + $0x40] sm:$0xff] 0.0
          %311 = vst [vmem:[#allocation2 + $0x48] sm:$0xff] 0.0
          %312 = vst [vmem:[#allocation2 + $0x50] sm:$0xff] 0.0
          %313 = vst [vmem:[#allocation2 + $0x58] sm:$0xff] 0.0
          %314 = vst [vmem:[#allocation2 + $0x60] sm:$0xff] 0.0
          %315 = vst [vmem:[#allocation2 + $0x68] sm:$0xff] 0.0
          %316 = vst [vmem:[#allocation2 + $0x70] sm:$0xff] 0.0
          %317 = vst [vmem:[#allocation2 + $0x78] sm:$0xff] 0.0
        $region77: #{tpu_custom_call.1} parent=68 // pred_fallthru
          _
        %v318 = vld [vmem:[#allocation2] sm:$0xff]
        %v319 = vld [vmem:[#allocation2 + $0x8] sm:$0xff]
        %v320 = vld [vmem:[#allocation2 + $0x10] sm:$0xff]
        %v321 = vld [vmem:[#allocation2 + $0x18] sm:$0xff]
        %v322 = vld [vmem:[#allocation2 + $0x20] sm:$0xff]
        %v323 = vld [vmem:[#allocation2 + $0x28] sm:$0xff]
        %v324 = vld [vmem:[#allocation2 + $0x30] sm:$0xff]
        %v325 = vld [vmem:[#allocation2 + $0x38] sm:$0xff]
        %v326 = vld [vmem:[#allocation2 + $0x40] sm:$0xff]
        %v327 = vld [vmem:[#allocation2 + $0x48] sm:$0xff]
        %v328 = vld [vmem:[#allocation2 + $0x50] sm:$0xff]
        %v329 = vld [vmem:[#allocation2 + $0x58] sm:$0xff]
        %v330 = vld [vmem:[#allocation2 + $0x60] sm:$0xff]
        %v331 = vld [vmem:[#allocation2 + $0x68] sm:$0xff]
        %v332 = vld [vmem:[#allocation2 + $0x70] sm:$0xff]
        %v333 = vld [vmem:[#allocation2 + $0x78] sm:$0xff]
        %v334 = vld [vmem:[%s290] sm:$0xf]
        %v335 = vld [vmem:[%s290 + $0x4] sm:$0xf]
        %v336 = vld [vmem:[%s290 + $0x8] sm:$0xf]
        %v337 = vld [vmem:[%s290 + $0xc] sm:$0xf]
        %v338 = vld [vmem:[%s290 + $0x10] sm:$0xf]
        %v339 = vld [vmem:[%s290 + $0x14] sm:$0xf]
        %v340 = vld [vmem:[%s290 + $0x18] sm:$0xf]
        %v341 = vld [vmem:[%s290 + $0x1c] sm:$0xf]
        %v342 = vld [vmem:[%s290 + $0x20] sm:$0xf]
        %v343 = vld [vmem:[%s290 + $0x24] sm:$0xf]
        %v344 = vld [vmem:[%s290 + $0x28] sm:$0xf]
        %v345 = vld [vmem:[%s290 + $0x2c] sm:$0xf]
        %v346 = vld [vmem:[%s290 + $0x30] sm:$0xf]
        %v347 = vld [vmem:[%s290 + $0x34] sm:$0xf]
        %v348 = vld [vmem:[%s290 + $0x38] sm:$0xf]
        %v349 = vld [vmem:[%s290 + $0x3c] sm:$0xf]
        %v350 = vld [vmem:[%s251] sm:$0xf]
        %v351 = vld [vmem:[%s251 + $0x4] sm:$0xf]
        %v352 = vld [vmem:[%s251 + $0x8] sm:$0xf]
        %v353 = vld [vmem:[%s251 + $0xc] sm:$0xf]
        %v370 = vunpack.c.l.b16 %v334
        %v371 = vunpack.c.l.b16 %v335
        %v372 = vunpack.c.l.b16 %v336
        %v373 = vunpack.c.l.b16 %v337
        %v374 = vunpack.c.l.b16 %v338
        %v375 = vunpack.c.l.b16 %v339
        %v376 = vunpack.c.l.b16 %v340
        %v377 = vunpack.c.l.b16 %v341
        %v378 = vunpack.c.l.b16 %v342
        %v379 = vunpack.c.l.b16 %v343
        %v380 = vunpack.c.l.b16 %v344
        %v381 = vunpack.c.l.b16 %v345
        %v382 = vunpack.c.l.b16 %v346
        %v383 = vunpack.c.l.b16 %v347
        %v384 = vunpack.c.l.b16 %v348
        %v385 = vunpack.c.l.b16 %v349
        %v386 = vpack.c.b16 %v371, %v370
        %v387 = vpack.c.b16 %v373, %v372
        %v388 = vpack.c.b16 %v375, %v374
        %v389 = vpack.c.b16 %v377, %v376
        %v390 = vpack.c.b16 %v379, %v378
        %v391 = vpack.c.b16 %v381, %v380
        %v392 = vpack.c.b16 %v383, %v382
        %v393 = vpack.c.b16 %v385, %v384
        %v398 = vunpack.c.l.b16 %v350
        %v399 = vunpack.c.l.b16 %v351
        %v400 = vunpack.c.l.b16 %v352
        %v401 = vunpack.c.l.b16 %v353
        %v402 = vpack.c.b16 %v399, %v398
        %v403 = vpack.c.b16 %v401, %v400
        %vm406 = vcmask 261120
        %v408 = vsel %vm406, %v386, 0
        %v411 = vsel %vm406, %v387, 0
        %v414 = vsel %vm406, %v388, 0
        %v417 = vsel %vm406, %v389, 0
        %v420 = vsel %vm406, %v390, 0
        %v423 = vsel %vm406, %v391, 0
        %v426 = vsel %vm406, %v392, 0
        %v429 = vsel %vm406, %v393, 0
        %431 = vmatprep.subr.bf16.mxu0 0
        %432 = vmatpush1.bf16.msra.mxu0 %v402
        %433 = vmatprep.subr.bf16.mxu0 0
        %434 = vmatpush1.bf16.msra.mxu0 %v403
        %435 = vmatprep.subr.bf16.mxu0 0
        %436 = vmatpush1.bf16.msra.mxu0 0
        %437 = vmatprep.subr.bf16.mxu0 0
        %438 = vmatpush1.bf16.msra.mxu0 0
        %439 = vmatprep.subr.bf16.mxu0 0
        %440 = vmatpush1.bf16.msra.mxu0 0
        %441 = vmatprep.subr.bf16.mxu0 0
        %442 = vmatpush1.bf16.msra.mxu0 0
        %443 = vmatprep.subr.bf16.mxu0 0
        %444 = vmatpush1.bf16.msra.mxu0 0
        %445 = vmatprep.subr.bf16.mxu0 0
        %446 = vmatpush1.bf16.msra.mxu0 0
        %447 = vmatprep.subr.bf16.mxu0 0
        %448 = vmatpush1.bf16.msra.mxu0 0
        %449 = vmatprep.subr.bf16.mxu0 0
        %450 = vmatpush1.bf16.msra.mxu0 0
        %451 = vmatprep.subr.bf16.mxu0 0
        %452 = vmatpush1.bf16.msra.mxu0 0
        %453 = vmatprep.subr.bf16.mxu0 0
        %454 = vmatpush1.bf16.msra.mxu0 0
        %455 = vmatprep.subr.bf16.mxu0 0
        %456 = vmatpush1.bf16.msra.mxu0 0
        %457 = vmatprep.subr.bf16.mxu0 0
        %458 = vmatpush1.bf16.msra.mxu0 0
        %459 = vmatprep.subr.bf16.mxu0 0
        %460 = vmatpush1.bf16.msra.mxu0 0
        %461 = vmatprep.subr.bf16.mxu0 0
        %462 = vmatpush1.bf16.msra.mxu0 0
        %463 = vmatprep.mubr.bf16.mxu0 0
        %464 = vmatmul.mubr.bf16.gmra.mrb[0].mxu0 %v408
        %v465 = vpop.f32.mrb[0].mxu0
        %v466 = vadd.f32 0.0, %v465
        %v467 = vpop.f32.mrb[0].mxu0
        %v468 = vpop.f32.mrb[0].mxu0
        %v469 = vadd.f32 0.0, %v468
        %v470 = vpop.f32.mrb[0].mxu0
        %471 = vmatprep.mubr.bf16.mxu0 0
        %472 = vmatmul.mubr.bf16.gmra.mrb[0].mxu0 %v411
        %v473 = vpop.f32.mrb[0].mxu0
        %v474 = vadd.f32 0.0, %v473
        %v475 = vpop.f32.mrb[0].mxu0
        %v476 = vpop.f32.mrb[0].mxu0
        %v477 = vadd.f32 0.0, %v476
        %v478 = vpop.f32.mrb[0].mxu0
        %479 = vmatprep.mubr.bf16.mxu0 0
        %480 = vmatmul.mubr.bf16.gmra.mrb[0].mxu0 %v414
        %v481 = vpop.f32.mrb[0].mxu0
        %v482 = vadd.f32 0.0, %v481
        %v483 = vpop.f32.mrb[0].mxu0
        %v484 = vpop.f32.mrb[0].mxu0
        %v485 = vadd.f32 0.0, %v484
        %v486 = vpop.f32.mrb[0].mxu0
        %487 = vmatprep.mubr.bf16.mxu0 0
        %488 = vmatmul.mubr.bf16.gmra.mrb[0].mxu0 %v417
        %v489 = vpop.f32.mrb[0].mxu0
        %v490 = vadd.f32 0.0, %v489
        %v491 = vpop.f32.mrb[0].mxu0
        %v492 = vpop.f32.mrb[0].mxu0
        %v493 = vadd.f32 0.0, %v492
        %v494 = vpop.f32.mrb[0].mxu0
        %495 = vmatprep.mubr.bf16.mxu0 0
        %496 = vmatmul.mubr.bf16.gmra.mrb[0].mxu0 %v420
        %v497 = vpop.f32.mrb[0].mxu0
        %v498 = vadd.f32 0.0, %v497
        %v499 = vpop.f32.mrb[0].mxu0
        %v500 = vpop.f32.mrb[0].mxu0
        %v501 = vadd.f32 0.0, %v500
        %v502 = vpop.f32.mrb[0].mxu0
        %503 = vmatprep.mubr.bf16.mxu0 0
        %504 = vmatmul.mubr.bf16.gmra.mrb[0].mxu0 %v423
        %v505 = vpop.f32.mrb[0].mxu0
        %v506 = vadd.f32 0.0, %v505
        %v507 = vpop.f32.mrb[0].mxu0
        %v508 = vpop.f32.mrb[0].mxu0
        %v509 = vadd.f32 0.0, %v508
        %v510 = vpop.f32.mrb[0].mxu0
        %511 = vmatprep.mubr.bf16.mxu0 0
        %512 = vmatmul.mubr.bf16.gmra.mrb[0].mxu0 %v426
        %v513 = vpop.f32.mrb[0].mxu0
        %v514 = vadd.f32 0.0, %v513
        %v515 = vpop.f32.mrb[0].mxu0
        %v516 = vpop.f32.mrb[0].mxu0
        %v517 = vadd.f32 0.0, %v516
        %v518 = vpop.f32.mrb[0].mxu0
        %519 = vmatprep.mubr.bf16.mxu0 0
        %520 = vmatmul.mubr.bf16.gmra.mrb[0].mxu0 %v429
        %v521 = vpop.f32.mrb[0].mxu0
        %v522 = vadd.f32 0.0, %v521
        %v523 = vpop.f32.mrb[0].mxu0
        %v524 = vpop.f32.mrb[0].mxu0
        %v525 = vadd.f32 0.0, %v524
        %v526 = vpop.f32.mrb[0].mxu0
        %527 = vdwg.mxu0
        %v528 = vadd.f32 %v318, %v466
        %v529 = vadd.f32 %v319, %v469
        %v530 = vadd.f32 %v320, %v474
        %v531 = vadd.f32 %v321, %v477
        %v532 = vadd.f32 %v322, %v482
        %v533 = vadd.f32 %v323, %v485
        %v534 = vadd.f32 %v324, %v490
        %v535 = vadd.f32 %v325, %v493
        %v536 = vadd.f32 %v326, %v498
        %v537 = vadd.f32 %v327, %v501
        %v538 = vadd.f32 %v328, %v506
        %v539 = vadd.f32 %v329, %v509
        %v540 = vadd.f32 %v330, %v514
        %v541 = vadd.f32 %v331, %v517
        %v542 = vadd.f32 %v332, %v522
        %v543 = vadd.f32 %v333, %v525
        %544 = vst [vmem:[#allocation2] sm:$0xff] %v528
        %545 = vst [vmem:[#allocation2 + $0x8] sm:$0xff] %v529
        %546 = vst [vmem:[#allocation2 + $0x10] sm:$0xff] %v530
        %547 = vst [vmem:[#allocation2 + $0x18] sm:$0xff] %v531
        %548 = vst [vmem:[#allocation2 + $0x20] sm:$0xff] %v532
        %549 = vst [vmem:[#allocation2 + $0x28] sm:$0xff] %v533
        %550 = vst [vmem:[#allocation2 + $0x30] sm:$0xff] %v534
        %551 = vst [vmem:[#allocation2 + $0x38] sm:$0xff] %v535
        %552 = vst [vmem:[#allocation2 + $0x40] sm:$0xff] %v536
        %553 = vst [vmem:[#allocation2 + $0x48] sm:$0xff] %v537
        %554 = vst [vmem:[#allocation2 + $0x50] sm:$0xff] %v538
        %555 = vst [vmem:[#allocation2 + $0x58] sm:$0xff] %v539
        %556 = vst [vmem:[#allocation2 + $0x60] sm:$0xff] %v540
        %557 = vst [vmem:[#allocation2 + $0x68] sm:$0xff] %v541
        %558 = vst [vmem:[#allocation2 + $0x70] sm:$0xff] %v542
        %559 = vst [vmem:[#allocation2 + $0x78] sm:$0xff] %v543
        // Predicated region
        $region78: #{tpu_custom_call.1} parent=68 // pred_check
          %p560 = pneg %p298
        $region79: #{tpu_custom_call.1} parent=68 // pred_check_branch
          %562 = sbr.rel (%p560) target = $region81
        $region80: #{tpu_custom_call.1} parent=68 // pred_region
          %v563 = vld [vmem:[#allocation2] sm:$0xff]
          %v564 = vld [vmem:[#allocation2 + $0x8] sm:$0xff]
          %v565 = vld [vmem:[#allocation2 + $0x10] sm:$0xff]
          %v566 = vld [vmem:[#allocation2 + $0x18] sm:$0xff]
          %v567 = vld [vmem:[#allocation2 + $0x20] sm:$0xff]
          %v568 = vld [vmem:[#allocation2 + $0x28] sm:$0xff]
          %v569 = vld [vmem:[#allocation2 + $0x30] sm:$0xff]
          %v570 = vld [vmem:[#allocation2 + $0x38] sm:$0xff]
          %v571 = vld [vmem:[#allocation2 + $0x40] sm:$0xff]
          %v572 = vld [vmem:[#allocation2 + $0x48] sm:$0xff]
          %v573 = vld [vmem:[#allocation2 + $0x50] sm:$0xff]
          %v574 = vld [vmem:[#allocation2 + $0x58] sm:$0xff]
          %v575 = vld [vmem:[#allocation2 + $0x60] sm:$0xff]
          %v576 = vld [vmem:[#allocation2 + $0x68] sm:$0xff]
          %v577 = vld [vmem:[#allocation2 + $0x70] sm:$0xff]
          %v578 = vld [vmem:[#allocation2 + $0x78] sm:$0xff]
          %v579 = vld [vmem:[%s295] sm:$0x1]
          %v581 = vlaneseq
          %v582 = vshrl.u32 %v581, 7
          %v583 = vsub.s32 0, %v582
          %v584 = vrot.slane %v579, %v583
          %v586 = vadd.f32 %v563, %v584
          %v587 = vadd.f32 %v564, %v584
          %v588 = vadd.f32 %v565, %v584
          %v589 = vadd.f32 %v566, %v584
          %v590 = vadd.f32 %v567, %v584
          %v591 = vadd.f32 %v568, %v584
          %v592 = vadd.f32 %v569, %v584
          %v593 = vadd.f32 %v570, %v584
          %v594 = vadd.f32 %v571, %v584
          %v595 = vadd.f32 %v572, %v584
          %v596 = vadd.f32 %v573, %v584
          %v597 = vadd.f32 %v574, %v584
          %v598 = vadd.f32 %v575, %v584
          %v599 = vadd.f32 %v576, %v584
          %v600 = vadd.f32 %v577, %v584
          %v601 = vadd.f32 %v578, %v584
          %602 = vst [vmem:[%s282] sm:$0xff] %v586
          %603 = vst [vmem:[%s282 + $0x8] sm:$0xff] %v587
          %604 = vst [vmem:[%s282 + $0x10] sm:$0xff] %v588
          %605 = vst [vmem:[%s282 + $0x18] sm:$0xff] %v589
          %606 = vst [vmem:[%s282 + $0x20] sm:$0xff] %v590
          %607 = vst [vmem:[%s282 + $0x28] sm:$0xff] %v591
          %608 = vst [vmem:[%s282 + $0x30] sm:$0xff] %v592
          %609 = vst [vmem:[%s282 + $0x38] sm:$0xff] %v593
          %610 = vst [vmem:[%s282 + $0x40] sm:$0xff] %v594
          %611 = vst [vmem:[%s282 + $0x48] sm:$0xff] %v595
          %612 = vst [vmem:[%s282 + $0x50] sm:$0xff] %v596
          %613 = vst [vmem:[%s282 + $0x58] sm:$0xff] %v597
          %614 = vst [vmem:[%s282 + $0x60] sm:$0xff] %v598
          %615 = vst [vmem:[%s282 + $0x68] sm:$0xff] %v599
          %616 = vst [vmem:[%s282 + $0x70] sm:$0xff] %v600
          %617 = vst [vmem:[%s282 + $0x78] sm:$0xff] %v601
        $region81: #{tpu_custom_call.1} parent=68 // pred_fallthru
          _
        %s618 = sand.u32 %s128, 1
        %s619 = scalar_lea.sflag [#allocation5], %s618
        %s620 = sand.u32 %s128, 1
        %s621 = smul.addr %s620, 128
        %s622 = scalar_lea.vmem [#allocation4], %s621
        // Predicated region
        $region82: #{tpu_custom_call.1} parent=68 // pred_check
          %p623 = pneg %p138
        $region83: #{tpu_custom_call.1} parent=68 // pred_check_branch
          %625 = sbr.rel (%p623) target = $region85
        $region84: #{tpu_custom_call.1} parent=68 // pred_region
          %s626 = smul.u32 16, %s22
          %s628 = ssub.s32 2048, 2048
          %629 = vsyncadd %s619, %s628
          %s630 = smul.addr %s626, 3
          %s631 = sadd.s32 %s23, %s630
          %s632 = smul.addr %s631, 128
          %s633 = scalar_lea.hbm %s3, %s632
          %s634 = sshll.u32 %s622, 4
          %s635 = int_to_ptr.vmem [resolvable:$true] %s634
          %640 = dma.vmem_to_hbm [thread:$0]  %s635, 2048, %s633, %s619, 128, 384, 8
        $region85: #{tpu_custom_call.1} parent=68 // pred_fallthru
          _
      $region69: #{tpu_custom_call.1} parent=5 // pred_fallthru
        _
      %p641 = scmp.le.s32.totalorder 2, %s12
      // Predicated region
      $region86: #{tpu_custom_call.1} parent=5 // pred_check
        %p642 = pneg %p641
      $region87: #{tpu_custom_call.1} parent=5 // pred_check_branch
        %644 = sbr.rel (%p642) target = $region89
      $region88: #{tpu_custom_call.1} parent=5 // pred_region
        %s645 = ssub.s32 %s12, 2
        // Predicated region
        $region90: #{tpu_custom_call.1} parent=88 // pred_check
          %p646 = pneg %p144
        $region91: #{tpu_custom_call.1} parent=88 // pred_check_branch
          %648 = sbr.rel (%p646) target = $region93
        $region92: #{tpu_custom_call.1} parent=88 // pred_region
          %s649 = sand.u32 %s129, 1
          %s650 = scalar_lea.sflag [#allocation5], %s649
          %s651 = sand.u32 %s129, 1
          %s652 = smul.addr %s651, 128
          %s653 = scalar_lea.vmem [#allocation4], %s652
          %654 = dma.done %s650, 2048
        $region93: #{tpu_custom_call.1} parent=88 // pred_fallthru
          _
      $region89: #{tpu_custom_call.1} parent=5 // pred_fallthru
        _
    $region6: #{tpu_custom_call.1} parent=1 // loop_footer
      %s16 = sadd.s32 1, %s12
    $region7: #{tpu_custom_call.1} parent=1 // loop_footer_branch
      %11 = sbr.rel target = $region3
    $region8: #{tpu_custom_call.1} parent=1 // loop_exit
      _
    %655 = vsyncpa [#allocation5], 1
    %s656 = scalar_lea.sflag [#allocation5], 1
    %657 = vsyncpa %s656, 1

</llo_original>
